<compile_context>
chip_gen: v7x
topology: tpu7x:2x2x1
jax: 0.10.0
libtpu: 0.0.40
codegen_flags: <defaults>
</compile_context>

<pallas_src>
import functools

import jax
import jax.numpy as jnp
from jax.experimental import pallas as pl
from jax.experimental.pallas import tpu as pltpu


def _round_up(v, m):
    return -(-v // m) * m


def _group_conv_kernel(x_ref, w2k_ref, m3_ref, bias_ref, o_ref, *, K, W, use_mxu):
    """One batch-block (NB images) of the fused GroupConv.

    x_ref   : (NB, C, LW)    f32  lanes = flattened spatial h*W+w (+ shift headroom)
    w2k_ref : (C, G*K*K)     f32  depthwise taps with split_in folded in; col = g*K*K + t
    m3_ref  : (OC, G*C)      f32  split_out mixing matrix; col = g*C + c
    bias_ref: (OC, 1)        f32  folded depthwise + split_out bias
    o_ref   : (NB, OC, Lout) f32  lane-dense output slab
    """
    NB, C, _ = x_ref.shape
    _, OC, Lout = o_ref.shape
    KK = K * K
    G = w2k_ref.shape[1] // KK

    # Hoist the bias broadcast out of every loop (JAX does not CSE broadcasts).
    bias = jnp.broadcast_to(bias_ref[...], (OC, Lout))

    for nb in range(NB):
        # Depthwise KxK VALID conv with the split_in xG fan-out done in-kernel:
        # each shifted x slice is loaded once and shared by all G replica taps.
        # Two partial accumulators per replica break the serial add chain (ILP).
        acc = [[jnp.zeros((C, Lout), jnp.float32) for _ in range(2)]
               for _ in range(G)]
        for t in range(KK):
            p, q = divmod(t, K)
            d = p * W + q                          # static flat-spatial lane shift
            xt = x_ref[nb, :, d:d + Lout]          # (C, Lout), one load per tap
            for g in range(G):
                tap = w2k_ref[:, g * KK + t:g * KK + t + 1]      # (C, 1)
                acc[g][t & 1] = acc[g][t & 1] + xt * tap

        # split_out (1x1 grouped conv): channel contraction over the C sublane
        # rows, one (OC, C) block per replica g.
        out = bias
        for g in range(G):
            a = acc[g][0] + acc[g][1]
            if use_mxu:
                out = out + jnp.dot(m3_ref[:, g * C:(g + 1) * C], a,
                                    preferred_element_type=jnp.float32)
            else:
                # Truly tiny C: broadcasted VPU outer-product accumulation.
                for c in range(C):
                    col = g * C + c
                    out = out + m3_ref[:, col:col + 1] * a[c:c + 1, :]

        o_ref[nb] = out.astype(o_ref.dtype)


def group_conv_forward(x, params, *, kernel_size, groups, images_per_step=None,
                       x_pipeline_depth=None, return_lane_dense=False):
    """Pallas implementation of GroupConv.forward. x: (N, C, H, W)."""
    w1, b1, w2, b2, w3, b3 = params
    N, C, H, W = x.shape
    G, K = groups, kernel_size
    CG = C * G
    OC = b3.shape[0]
    assert OC % G == 0, "split_out requires out_channels % groups == 0"
    opg = OC // G
    assert w1.shape == (CG, 1, 1, 1) and w2.shape == (CG, 1, K, K)
    assert w3.shape == (OC, C, 1, 1)
    Ho, Wo = H - K + 1, W - K + 1
    f32 = jnp.float32
    KK = K * K

    # ---- Fold split_in (per-intermediate-channel affine) into the depthwise
    #      conv (VALID padding only): w2_eff = w2*w1, b2_eff = b2 + b1*sum(w2).
    w1f = w1.reshape(CG).astype(f32)
    w2f = w2.reshape(CG, K, K).astype(f32)
    w2_eff = w2f * w1f[:, None, None]                                     # (CG,K,K), ic = c*G+g
    b2_eff = b2.astype(f32) + b1.astype(f32) * jnp.sum(w2f, axis=(1, 2))  # (CG,)

    # ---- split_out as a dense (OC, CG) mixing matrix (PyTorch grouping is by
    #      consecutive intermediate index: group = ic // C), with the depthwise
    #      bias folded into the output bias.
    w3f = w3.reshape(OC, C).astype(f32)
    same_group = (jnp.arange(OC)[:, None] // opg) == (jnp.arange(CG)[None, :] // C)
    m3_single = jnp.where(same_group, w3f[:, jnp.arange(CG) % C], 0.0)    # (OC, CG)
    bias_col = (b3.astype(f32) + m3_single @ b2_eff)[:, None]             # (OC, 1)

    # ---- Re-index the weights for the in-kernel fan-out: (c, g) instead of
    #      the intermediate index ic = c*G + g.
    w2k = w2_eff.reshape(C, G, KK).reshape(C, G * KK)                      # (C, G*KK)
    m3 = m3_single.reshape(OC, C, G).transpose(0, 2, 1).reshape(OC, G * C)  # col = g*C+c

    # Lane-dense widths (multiples of 128): compute width + tap-shift headroom.
    # TODO(synk): for production H*W, add an H-halo spatial grid axis (blocked
    # lane dim with a (K-1)*W+(K-1) halo) instead of one full-width block/row.
    Lout = _round_up(H * W, 128)
    LW = _round_up(Lout + (K - 1) * W + (K - 1), 128)

    # ---- Batch blocking: keep several grid steps so BlockSpec double-buffering
    #      overlaps HBM DMA with compute and the "parallel" axis can be sharded
    #      across v7x's two TensorCores; cap the per-step x block at ~2 MiB.
    if images_per_step is None:
        target_steps = min(N, 4) if N >= 2 else 1
        nb_vmem_cap = max(1, (2 << 20) // max(1, 4 * C * LW))
        NB = max(1, min(N // target_steps, nb_vmem_cap))
    else:
        NB = max(1, min(images_per_step, N))
    n_steps = -(-N // NB)
    N_pad = n_steps * NB

    # ---- Input layout: (image, channel) leading/sublane axes, lanes = flat
    #      spatial (zero-padded).  No xG repeat here -- fan-out is in-kernel.
    x_rows = x.astype(f32).reshape(N, C, H * W)
    x_rows = jnp.pad(x_rows, ((0, N_pad - N), (0, 0), (0, LW - H * W)))   # (N_pad, C, LW)

    use_mxu = C >= 8    # MXU for the split_out contraction unless C is tiny
    kernel = functools.partial(_group_conv_kernel, K=K, W=W, use_mxu=use_mxu)

    # Explicit VMEM budget: double-buffered x/out blocks + weights, clamped so
    # it also fits v7x's 64 MiB physical VMEM with headroom (<= 48 MiB).
    step_bytes = 4 * (2 * NB * C * LW + 2 * NB * OC * Lout
                      + C * G * KK + OC * G * C + OC)
    vmem_limit = int(min(48 << 20, max(8 << 20, 4 * step_bytes)))

    x_spec_kwargs = {}
    if x_pipeline_depth is not None:
        # Deeper x prefetch if DMA latency is still exposed (costs extra VMEM).
        x_spec_kwargs["pipeline_mode"] = pl.Buffered(x_pipeline_depth)

    out_slab = pl.pallas_call(
        kernel,
        out_shape=jax.ShapeDtypeStruct((N_pad, OC, Lout), f32),
        grid=(n_steps,),
        in_specs=[
            pl.BlockSpec((NB, C, LW), lambda b: (b, 0, 0), **x_spec_kwargs),
            pl.BlockSpec((C, G * KK), lambda b: (0, 0)),
            pl.BlockSpec((OC, G * C), lambda b: (0, 0)),
            pl.BlockSpec((OC, 1), lambda b: (0, 0)),
        ],
        out_specs=pl.BlockSpec((NB, OC, Lout), lambda b: (b, 0, 0)),
        compiler_params=pltpu.CompilerParams(
            dimension_semantics=("parallel",),
            vmem_limit_bytes=vmem_limit),
    )(x_rows, w2k, m3, bias_col)

    if return_lane_dense:
        # Consumers that can read the lane-dense slab directly skip a full
        # output HBM round trip; valid data: [:N, :, h*W + w] for h<Ho, w<Wo.
        return out_slab

    # De-layout outside the kernel (cheap XLA slice/reshape) when a dense
    # (N, OC, Ho, Wo) array is actually required.
    out = out_slab[:N, :, :H * W].reshape(N, OC, H, W)[:, :, :Ho, :Wo]
    return out.astype(x.dtype)


def ref_forward(x, params, *, groups):
    """Pure-JAX reference mirroring the PyTorch module (for validation)."""
    w1, b1, w2, b2, w3, b3 = params
    C = x.shape[1]
    CG = C * groups

    def conv(h, w, b, g):
        y = jax.lax.conv_general_dilated(
            h, w, window_strides=(1, 1), padding="VALID",
            dimension_numbers=("NCHW", "OIHW", "NCHW"),
            feature_group_count=g)
        return y + b[None, :, None, None]

    y = conv(x, w1, b1, C)        # split_in: groups = in_channels
    y = conv(y, w2, b2, CG)       # group_conv: depthwise
    y = conv(y, w3, b3, groups)   # split_out: groups = groups
    return y


if __name__ == "__main__":
    # GroupConv(in_channels=4, out_channels=4, kernel_size=3, groups=2)
    in_channels, out_channels, kernel_size, groups = 4, 4, 3, 2
    N, H, W = 2, 16, 16
    CG = in_channels * groups

    key = jax.random.PRNGKey(0)
    ks = jax.random.split(key, 7)
    x = jax.random.normal(ks[0], (N, in_channels, H, W), jnp.float32)

    # Deterministic synthetic parameters (shapes match nn.Conv2d weights/biases).
    w1 = jax.random.normal(ks[1], (CG, 1, 1, 1), jnp.float32) * 0.5
    b1 = jax.random.normal(ks[2], (CG,), jnp.float32) * 0.1
    w2 = jax.random.normal(ks[3], (CG, 1, kernel_size, kernel_size), jnp.float32) * 0.3
    b2 = jax.random.normal(ks[4], (CG,), jnp.float32) * 0.1
    w3 = jax.random.normal(ks[5], (out_channels, in_channels, 1, 1), jnp.float32) * 0.5
    b3 = jax.random.normal(ks[6], (out_channels,), jnp.float32) * 0.1
    params = (w1, b1, w2, b2, w3, b3)

    out = group_conv_forward(x, params, kernel_size=kernel_size, groups=groups)
    out = jax.block_until_ready(out)

    ref = ref_forward(x, params, groups=groups)
    assert out.shape == ref.shape, (out.shape, ref.shape)
    if not bool(jnp.allclose(out, ref, atol=1e-4, rtol=1e-4)):
        raise AssertionError("Pallas kernel does not match reference conv output")

    print("KERNEL_OK")
</pallas_src>

<mosaic_0001>
module attributes {stable_mosaic.version = 11 : i64} {
  func.func @_group_conv_kernel(%arg0: i32, %arg1: memref<1x4x384xf32, #tpu.memory_space<vmem>>, %arg2: memref<4x18xf32, #tpu.memory_space<vmem>>, %arg3: memref<4x8xf32, #tpu.memory_space<vmem>>, %arg4: memref<4x1xf32, #tpu.memory_space<vmem>>, %arg5: memref<1x4x256xf32, #tpu.memory_space<vmem>>) attributes {dimension_semantics = [#tpu.dimension_semantics<parallel>], iteration_bounds = array<i64: 2>, scalar_prefetch = 0 : i64, scratch_operands = 0 : i64, tpu.core_type = #tpu.core_type<tc>, window_params = [{transform_indices = @transform_0, window_bounds = array<i64: 1, 4, 384>}, {pipeline_mode = #tpu.pipeline_mode<synchronous>, transform_indices = @transform_1, window_bounds = array<i64: 4, 18>}, {pipeline_mode = #tpu.pipeline_mode<synchronous>, transform_indices = @transform_2, window_bounds = array<i64: 4, 8>}, {pipeline_mode = #tpu.pipeline_mode<synchronous>, transform_indices = @transform_3, window_bounds = array<i64: 4, 1>}, {transform_indices = @transform_4, window_bounds = array<i64: 1, 4, 256>}]} {
    %c0 = arith.constant 0 : index
    %c0_0 = arith.constant 0 : index
    %0 = vector.load %arg4[%c0, %c0_0] : memref<4x1xf32, #tpu.memory_space<vmem>>, vector<4x1xf32>
    %1 = vector.shape_cast %0 : vector<4x1xf32> to vector<4x1xf32>
    %2 = vector.broadcast %1 : vector<4x1xf32> to vector<4x256xf32>
    %cst = arith.constant 0.000000e+00 : f32
    %3 = vector.broadcast %cst : f32 to vector<4x256xf32>
    %cst_1 = arith.constant 0.000000e+00 : f32
    %4 = vector.broadcast %cst_1 : f32 to vector<4x256xf32>
    %cst_2 = arith.constant 0.000000e+00 : f32
    %5 = vector.broadcast %cst_2 : f32 to vector<4x256xf32>
    %cst_3 = arith.constant 0.000000e+00 : f32
    %6 = vector.broadcast %cst_3 : f32 to vector<4x256xf32>
    %c0_4 = arith.constant 0 : index
    %c0_5 = arith.constant 0 : index
    %c0_6 = arith.constant 0 : index
    %7 = vector.load %arg1[%c0_4, %c0_5, %c0_6] : memref<1x4x384xf32, #tpu.memory_space<vmem>>, vector<1x4x256xf32>
    %8 = vector.shape_cast %7 : vector<1x4x256xf32> to vector<4x256xf32>
    %c0_7 = arith.constant 0 : index
    %c0_8 = arith.constant 0 : index
    %9 = vector.load %arg2[%c0_7, %c0_8] : memref<4x18xf32, #tpu.memory_space<vmem>>, vector<4x1xf32>
    %10 = vector.broadcast %9 : vector<4x1xf32> to vector<4x256xf32>
    %11 = arith.mulf %8, %10 : vector<4x256xf32>
    %12 = arith.addf %3, %11 : vector<4x256xf32>
    %c0_9 = arith.constant 0 : index
    %c9 = arith.constant 9 : index
    %13 = vector.load %arg2[%c0_9, %c9] : memref<4x18xf32, #tpu.memory_space<vmem>>, vector<4x1xf32>
    %14 = vector.broadcast %13 : vector<4x1xf32> to vector<4x256xf32>
    %15 = arith.mulf %8, %14 : vector<4x256xf32>
    %16 = arith.addf %5, %15 : vector<4x256xf32>
    %c0_10 = arith.constant 0 : index
    %c0_11 = arith.constant 0 : index
    %c1 = arith.constant 1 : index
    %17 = vector.load %arg1[%c0_10, %c0_11, %c1] : memref<1x4x384xf32, #tpu.memory_space<vmem>>, vector<1x4x256xf32>
    %18 = vector.shape_cast %17 : vector<1x4x256xf32> to vector<4x256xf32>
    %c0_12 = arith.constant 0 : index
    %c1_13 = arith.constant 1 : index
    %19 = vector.load %arg2[%c0_12, %c1_13] : memref<4x18xf32, #tpu.memory_space<vmem>>, vector<4x1xf32>
    %20 = vector.broadcast %19 : vector<4x1xf32> to vector<4x256xf32>
    %21 = arith.mulf %18, %20 : vector<4x256xf32>
    %22 = arith.addf %4, %21 : vector<4x256xf32>
    %c0_14 = arith.constant 0 : index
    %c10 = arith.constant 10 : index
    %23 = vector.load %arg2[%c0_14, %c10] : memref<4x18xf32, #tpu.memory_space<vmem>>, vector<4x1xf32>
    %24 = vector.broadcast %23 : vector<4x1xf32> to vector<4x256xf32>
    %25 = arith.mulf %18, %24 : vector<4x256xf32>
    %26 = arith.addf %6, %25 : vector<4x256xf32>
    %c0_15 = arith.constant 0 : index
    %c0_16 = arith.constant 0 : index
    %c2 = arith.constant 2 : index
    %27 = vector.load %arg1[%c0_15, %c0_16, %c2] : memref<1x4x384xf32, #tpu.memory_space<vmem>>, vector<1x4x256xf32>
    %28 = vector.shape_cast %27 : vector<1x4x256xf32> to vector<4x256xf32>
    %c0_17 = arith.constant 0 : index
    %c2_18 = arith.constant 2 : index
    %29 = vector.load %arg2[%c0_17, %c2_18] : memref<4x18xf32, #tpu.memory_space<vmem>>, vector<4x1xf32>
    %30 = vector.broadcast %29 : vector<4x1xf32> to vector<4x256xf32>
    %31 = arith.mulf %28, %30 : vector<4x256xf32>
    %32 = arith.addf %12, %31 : vector<4x256xf32>
    %c0_19 = arith.constant 0 : index
    %c11 = arith.constant 11 : index
    %33 = vector.load %arg2[%c0_19, %c11] : memref<4x18xf32, #tpu.memory_space<vmem>>, vector<4x1xf32>
    %34 = vector.broadcast %33 : vector<4x1xf32> to vector<4x256xf32>
    %35 = arith.mulf %28, %34 : vector<4x256xf32>
    %36 = arith.addf %16, %35 : vector<4x256xf32>
    %c0_20 = arith.constant 0 : index
    %c0_21 = arith.constant 0 : index
    %c16 = arith.constant 16 : index
    %37 = vector.load %arg1[%c0_20, %c0_21, %c16] : memref<1x4x384xf32, #tpu.memory_space<vmem>>, vector<1x4x256xf32>
    %38 = vector.shape_cast %37 : vector<1x4x256xf32> to vector<4x256xf32>
    %c0_22 = arith.constant 0 : index
    %c3 = arith.constant 3 : index
    %39 = vector.load %arg2[%c0_22, %c3] : memref<4x18xf32, #tpu.memory_space<vmem>>, vector<4x1xf32>
    %40 = vector.broadcast %39 : vector<4x1xf32> to vector<4x256xf32>
    %41 = arith.mulf %38, %40 : vector<4x256xf32>
    %42 = arith.addf %22, %41 : vector<4x256xf32>
    %c0_23 = arith.constant 0 : index
    %c12 = arith.constant 12 : index
    %43 = vector.load %arg2[%c0_23, %c12] : memref<4x18xf32, #tpu.memory_space<vmem>>, vector<4x1xf32>
    %44 = vector.broadcast %43 : vector<4x1xf32> to vector<4x256xf32>
    %45 = arith.mulf %38, %44 : vector<4x256xf32>
    %46 = arith.addf %26, %45 : vector<4x256xf32>
    %c0_24 = arith.constant 0 : index
    %c0_25 = arith.constant 0 : index
    %c17 = arith.constant 17 : index
    %47 = vector.load %arg1[%c0_24, %c0_25, %c17] : memref<1x4x384xf32, #tpu.memory_space<vmem>>, vector<1x4x256xf32>
    %48 = vector.shape_cast %47 : vector<1x4x256xf32> to vector<4x256xf32>
    %c0_26 = arith.constant 0 : index
    %c4 = arith.constant 4 : index
    %49 = vector.load %arg2[%c0_26, %c4] : memref<4x18xf32, #tpu.memory_space<vmem>>, vector<4x1xf32>
    %50 = vector.broadcast %49 : vector<4x1xf32> to vector<4x256xf32>
    %51 = arith.mulf %48, %50 : vector<4x256xf32>
    %52 = arith.addf %32, %51 : vector<4x256xf32>
    %c0_27 = arith.constant 0 : index
    %c13 = arith.constant 13 : index
    %53 = vector.load %arg2[%c0_27, %c13] : memref<4x18xf32, #tpu.memory_space<vmem>>, vector<4x1xf32>
    %54 = vector.broadcast %53 : vector<4x1xf32> to vector<4x256xf32>
    %55 = arith.mulf %48, %54 : vector<4x256xf32>
    %56 = arith.addf %36, %55 : vector<4x256xf32>
    %c0_28 = arith.constant 0 : index
    %c0_29 = arith.constant 0 : index
    %c18 = arith.constant 18 : index
    %57 = vector.load %arg1[%c0_28, %c0_29, %c18] : memref<1x4x384xf32, #tpu.memory_space<vmem>>, vector<1x4x256xf32>
    %58 = vector.shape_cast %57 : vector<1x4x256xf32> to vector<4x256xf32>
    %c0_30 = arith.constant 0 : index
    %c5 = arith.constant 5 : index
    %59 = vector.load %arg2[%c0_30, %c5] : memref<4x18xf32, #tpu.memory_space<vmem>>, vector<4x1xf32>
    %60 = vector.broadcast %59 : vector<4x1xf32> to vector<4x256xf32>
    %61 = arith.mulf %58, %60 : vector<4x256xf32>
    %62 = arith.addf %42, %61 : vector<4x256xf32>
    %c0_31 = arith.constant 0 : index
    %c14 = arith.constant 14 : index
    %63 = vector.load %arg2[%c0_31, %c14] : memref<4x18xf32, #tpu.memory_space<vmem>>, vector<4x1xf32>
    %64 = vector.broadcast %63 : vector<4x1xf32> to vector<4x256xf32>
    %65 = arith.mulf %58, %64 : vector<4x256xf32>
    %66 = arith.addf %46, %65 : vector<4x256xf32>
    %c0_32 = arith.constant 0 : index
    %c0_33 = arith.constant 0 : index
    %c32 = arith.constant 32 : index
    %67 = vector.load %arg1[%c0_32, %c0_33, %c32] : memref<1x4x384xf32, #tpu.memory_space<vmem>>, vector<1x4x256xf32>
    %68 = vector.shape_cast %67 : vector<1x4x256xf32> to vector<4x256xf32>
    %c0_34 = arith.constant 0 : index
    %c6 = arith.constant 6 : index
    %69 = vector.load %arg2[%c0_34, %c6] : memref<4x18xf32, #tpu.memory_space<vmem>>, vector<4x1xf32>
    %70 = vector.broadcast %69 : vector<4x1xf32> to vector<4x256xf32>
    %71 = arith.mulf %68, %70 : vector<4x256xf32>
    %72 = arith.addf %52, %71 : vector<4x256xf32>
    %c0_35 = arith.constant 0 : index
    %c15 = arith.constant 15 : index
    %73 = vector.load %arg2[%c0_35, %c15] : memref<4x18xf32, #tpu.memory_space<vmem>>, vector<4x1xf32>
    %74 = vector.broadcast %73 : vector<4x1xf32> to vector<4x256xf32>
    %75 = arith.mulf %68, %74 : vector<4x256xf32>
    %76 = arith.addf %56, %75 : vector<4x256xf32>
    %c0_36 = arith.constant 0 : index
    %c0_37 = arith.constant 0 : index
    %c33 = arith.constant 33 : index
    %77 = vector.load %arg1[%c0_36, %c0_37, %c33] : memref<1x4x384xf32, #tpu.memory_space<vmem>>, vector<1x4x256xf32>
    %78 = vector.shape_cast %77 : vector<1x4x256xf32> to vector<4x256xf32>
    %c0_38 = arith.constant 0 : index
    %c7 = arith.constant 7 : index
    %79 = vector.load %arg2[%c0_38, %c7] : memref<4x18xf32, #tpu.memory_space<vmem>>, vector<4x1xf32>
    %80 = vector.broadcast %79 : vector<4x1xf32> to vector<4x256xf32>
    %81 = arith.mulf %78, %80 : vector<4x256xf32>
    %82 = arith.addf %62, %81 : vector<4x256xf32>
    %c0_39 = arith.constant 0 : index
    %c16_40 = arith.constant 16 : index
    %83 = vector.load %arg2[%c0_39, %c16_40] : memref<4x18xf32, #tpu.memory_space<vmem>>, vector<4x1xf32>
    %84 = vector.broadcast %83 : vector<4x1xf32> to vector<4x256xf32>
    %85 = arith.mulf %78, %84 : vector<4x256xf32>
    %86 = arith.addf %66, %85 : vector<4x256xf32>
    %c0_41 = arith.constant 0 : index
    %c0_42 = arith.constant 0 : index
    %c34 = arith.constant 34 : index
    %87 = vector.load %arg1[%c0_41, %c0_42, %c34] : memref<1x4x384xf32, #tpu.memory_space<vmem>>, vector<1x4x256xf32>
    %88 = vector.shape_cast %87 : vector<1x4x256xf32> to vector<4x256xf32>
    %c0_43 = arith.constant 0 : index
    %c8 = arith.constant 8 : index
    %89 = vector.load %arg2[%c0_43, %c8] : memref<4x18xf32, #tpu.memory_space<vmem>>, vector<4x1xf32>
    %90 = vector.broadcast %89 : vector<4x1xf32> to vector<4x256xf32>
    %91 = arith.mulf %88, %90 : vector<4x256xf32>
    %92 = arith.addf %72, %91 : vector<4x256xf32>
    %c0_44 = arith.constant 0 : index
    %c17_45 = arith.constant 17 : index
    %93 = vector.load %arg2[%c0_44, %c17_45] : memref<4x18xf32, #tpu.memory_space<vmem>>, vector<4x1xf32>
    %94 = vector.broadcast %93 : vector<4x1xf32> to vector<4x256xf32>
    %95 = arith.mulf %88, %94 : vector<4x256xf32>
    %96 = arith.addf %76, %95 : vector<4x256xf32>
    %97 = arith.addf %92, %82 : vector<4x256xf32>
    %c0_46 = arith.constant 0 : index
    %c0_47 = arith.constant 0 : index
    %98 = vector.load %arg3[%c0_46, %c0_47] : memref<4x8xf32, #tpu.memory_space<vmem>>, vector<4x1xf32>
    %99 = vector.extract_strided_slice %97 {offsets = [0, 0], sizes = [1, 256], strides = [1, 1]} : vector<4x256xf32> to vector<1x256xf32>
    %100 = vector.broadcast %98 : vector<4x1xf32> to vector<4x256xf32>
    %101 = vector.broadcast %99 : vector<1x256xf32> to vector<4x256xf32>
    %102 = arith.mulf %100, %101 : vector<4x256xf32>
    %103 = arith.addf %2, %102 : vector<4x256xf32>
    %c0_48 = arith.constant 0 : index
    %c1_49 = arith.constant 1 : index
    %104 = vector.load %arg3[%c0_48, %c1_49] : memref<4x8xf32, #tpu.memory_space<vmem>>, vector<4x1xf32>
    %105 = vector.extract_strided_slice %97 {offsets = [1, 0], sizes = [1, 256], strides = [1, 1]} : vector<4x256xf32> to vector<1x256xf32>
    %106 = vector.broadcast %104 : vector<4x1xf32> to vector<4x256xf32>
    %107 = vector.broadcast %105 : vector<1x256xf32> to vector<4x256xf32>
    %108 = arith.mulf %106, %107 : vector<4x256xf32>
    %109 = arith.addf %103, %108 : vector<4x256xf32>
    %c0_50 = arith.constant 0 : index
    %c2_51 = arith.constant 2 : index
    %110 = vector.load %arg3[%c0_50, %c2_51] : memref<4x8xf32, #tpu.memory_space<vmem>>, vector<4x1xf32>
    %111 = vector.extract_strided_slice %97 {offsets = [2, 0], sizes = [1, 256], strides = [1, 1]} : vector<4x256xf32> to vector<1x256xf32>
    %112 = vector.broadcast %110 : vector<4x1xf32> to vector<4x256xf32>
    %113 = vector.broadcast %111 : vector<1x256xf32> to vector<4x256xf32>
    %114 = arith.mulf %112, %113 : vector<4x256xf32>
    %115 = arith.addf %109, %114 : vector<4x256xf32>
    %c0_52 = arith.constant 0 : index
    %c3_53 = arith.constant 3 : index
    %116 = vector.load %arg3[%c0_52, %c3_53] : memref<4x8xf32, #tpu.memory_space<vmem>>, vector<4x1xf32>
    %117 = vector.extract_strided_slice %97 {offsets = [3, 0], sizes = [1, 256], strides = [1, 1]} : vector<4x256xf32> to vector<1x256xf32>
    %118 = vector.broadcast %116 : vector<4x1xf32> to vector<4x256xf32>
    %119 = vector.broadcast %117 : vector<1x256xf32> to vector<4x256xf32>
    %120 = arith.mulf %118, %119 : vector<4x256xf32>
    %121 = arith.addf %115, %120 : vector<4x256xf32>
    %122 = arith.addf %96, %86 : vector<4x256xf32>
    %c0_54 = arith.constant 0 : index
    %c4_55 = arith.constant 4 : index
    %123 = vector.load %arg3[%c0_54, %c4_55] : memref<4x8xf32, #tpu.memory_space<vmem>>, vector<4x1xf32>
    %124 = vector.extract_strided_slice %122 {offsets = [0, 0], sizes = [1, 256], strides = [1, 1]} : vector<4x256xf32> to vector<1x256xf32>
    %125 = vector.broadcast %123 : vector<4x1xf32> to vector<4x256xf32>
    %126 = vector.broadcast %124 : vector<1x256xf32> to vector<4x256xf32>
    %127 = arith.mulf %125, %126 : vector<4x256xf32>
    %128 = arith.addf %121, %127 : vector<4x256xf32>
    %c0_56 = arith.constant 0 : index
    %c5_57 = arith.constant 5 : index
    %129 = vector.load %arg3[%c0_56, %c5_57] : memref<4x8xf32, #tpu.memory_space<vmem>>, vector<4x1xf32>
    %130 = vector.extract_strided_slice %122 {offsets = [1, 0], sizes = [1, 256], strides = [1, 1]} : vector<4x256xf32> to vector<1x256xf32>
    %131 = vector.broadcast %129 : vector<4x1xf32> to vector<4x256xf32>
    %132 = vector.broadcast %130 : vector<1x256xf32> to vector<4x256xf32>
    %133 = arith.mulf %131, %132 : vector<4x256xf32>
    %134 = arith.addf %128, %133 : vector<4x256xf32>
    %c0_58 = arith.constant 0 : index
    %c6_59 = arith.constant 6 : index
    %135 = vector.load %arg3[%c0_58, %c6_59] : memref<4x8xf32, #tpu.memory_space<vmem>>, vector<4x1xf32>
    %136 = vector.extract_strided_slice %122 {offsets = [2, 0], sizes = [1, 256], strides = [1, 1]} : vector<4x256xf32> to vector<1x256xf32>
    %137 = vector.broadcast %135 : vector<4x1xf32> to vector<4x256xf32>
    %138 = vector.broadcast %136 : vector<1x256xf32> to vector<4x256xf32>
    %139 = arith.mulf %137, %138 : vector<4x256xf32>
    %140 = arith.addf %134, %139 : vector<4x256xf32>
    %c0_60 = arith.constant 0 : index
    %c7_61 = arith.constant 7 : index
    %141 = vector.load %arg3[%c0_60, %c7_61] : memref<4x8xf32, #tpu.memory_space<vmem>>, vector<4x1xf32>
    %142 = vector.extract_strided_slice %122 {offsets = [3, 0], sizes = [1, 256], strides = [1, 1]} : vector<4x256xf32> to vector<1x256xf32>
    %143 = vector.broadcast %141 : vector<4x1xf32> to vector<4x256xf32>
    %144 = vector.broadcast %142 : vector<1x256xf32> to vector<4x256xf32>
    %145 = arith.mulf %143, %144 : vector<4x256xf32>
    %146 = arith.addf %140, %145 : vector<4x256xf32>
    %c0_62 = arith.constant 0 : index
    %c0_63 = arith.constant 0 : index
    %c0_64 = arith.constant 0 : index
    %147 = vector.load %arg5[%c0_62, %c0_63, %c0_64] : memref<1x4x256xf32, #tpu.memory_space<vmem>>, vector<1x4x256xf32>
    %148 = vector.shape_cast %147 : vector<1x4x256xf32> to vector<4x256xf32>
    %149 = vector.shape_cast %146 : vector<4x256xf32> to vector<1x4x256xf32>
    tpu.vector_store %arg5[%c0_62, %c0_63, %c0_64], %149 {strides = array<i32>} : memref<1x4x256xf32, #tpu.memory_space<vmem>>, vector<1x4x256xf32>,
    return
  }
  func.func @transform_0(%arg0: i32) -> (i32, i32, i32) {
    %c0_i32 = arith.constant 0 : i32
    %c0_i32_0 = arith.constant 0 : i32
    %c0_i32_1 = arith.constant 0 : i32
    return %arg0, %c0_i32, %c0_i32_0 : i32, i32, i32
  }
  func.func @transform_1(%arg0: i32) -> (i32, i32) {
    %c0_i32 = arith.constant 0 : i32
    %c0_i32_0 = arith.constant 0 : i32
    %c0_i32_1 = arith.constant 0 : i32
    return %c0_i32, %c0_i32_0 : i32, i32
  }
  func.func @transform_2(%arg0: i32) -> (i32, i32) {
    %c0_i32 = arith.constant 0 : i32
    %c0_i32_0 = arith.constant 0 : i32
    %c0_i32_1 = arith.constant 0 : i32
    return %c0_i32, %c0_i32_0 : i32, i32
  }
  func.func @transform_3(%arg0: i32) -> (i32, i32) {
    %c0_i32 = arith.constant 0 : i32
    %c0_i32_0 = arith.constant 0 : i32
    %c0_i32_1 = arith.constant 0 : i32
    return %c0_i32, %c0_i32_0 : i32, i32
  }
  func.func @transform_4(%arg0: i32) -> (i32, i32, i32) {
    %c0_i32 = arith.constant 0 : i32
    %c0_i32_0 = arith.constant 0 : i32
    %c0_i32_1 = arith.constant 0 : i32
    return %arg0, %c0_i32, %c0_i32_0 : i32, i32, i32
  }
}

</mosaic_0001>

<llo_original>
// kernel: tpu_custom_call.1
$region0: #{tpu_custom_call.1}
  #allocation0 [shape = 'u32[]', space=smem, size = 0x4, offset = 0x4, fixed_abs, tag = 'smem constant byte address 0x4 - core index']
  #allocation1 [shape = 'u32[144,128]{1,0:T(1,128)}', space=vmem, size = 0x12000, scoped, tag = 'internal scratch']
  %s0 = inlined_call_operand.hbm [shape: f32[2,4,384], index: 0, kind: input, shape index: {}]
  %s1 = inlined_call_operand.vmem [shape: f32[4,18], index: 1, kind: input, shape index: {}]
  %s2 = inlined_call_operand.vmem [shape: f32[4,8], index: 2, kind: input, shape index: {}]
  %s3 = inlined_call_operand.vmem [shape: f32[4,1], index: 3, kind: input, shape index: {}]
  %s4 = inlined_call_operand.hbm [shape: f32[2,4,256], index: 4, kind: output, shape index: {}]
  %s5 = sld [smem:[#allocation0]]
  $region53: #{tpu_custom_call.1} parent=0
    _
  %s7 = ssub.s32 1, %s5
  %s8 = scalar_select 0, %s7, %s5
  $region1: #{tpu_custom_call.1} parent=0
    #allocation2 [shape = 'u8[12288]{0}', space=vmem, size = 0x3000, scoped, tag = 'input window, operand 0']
    #allocation3 [shape = 's32[2]{0}', space=sflag, size = 0x8, scoped, tag = 'scoped memory for tpu_custom_call.1']
    #allocation4 [shape = 's32[2]{0}', space=sflag, size = 0x8, scoped, tag = 'scoped memory for tpu_custom_call.1']
    #allocation5 [shape = 'u8[8192]{0}', space=vmem, size = 0x2000, scoped, tag = 'output window, operand 0']
    %9 = vsyncpa [#allocation3], 0
    %s10 = scalar_lea.sflag [#allocation3], 1
    %11 = vsyncpa %s10, 0
    %12 = vsyncpa [#allocation4], 0
    %s13 = scalar_lea.sflag [#allocation4], 1
    %14 = vsyncpa %s13, 0
    loop: start=0, step=1, limit=4
    $region2: #{tpu_custom_call.1} parent=1 // loop_pre_header
      _
    $region3: #{tpu_custom_call.1} parent=1 // loop_header
      %s16 = sphi 0, %s20
      %p17 = scmp.ge.s32.totalorder %s16, 4
      %s26 = sphi 0, %s28
      %s29 = sphi 0, %s26
      %s30 = sphi 0, %s29
      %s46 = sphi 0, %s30
      %s50 = sphi 0, %s50
      %s52 = sphi 0, %s50
      %s53 = sphi 0, %s52
      %s67 = sphi 0, %s53
      %s71 = sphi 0, %s71
      %s73 = sphi 0, %s71
      %s74 = sphi 0, %s73
      %s88 = sphi 0, %s74
      %s92 = sphi 0, %s92
      %s94 = sphi 0, %s92
      %s95 = sphi 0, %s94
      %s109 = sphi 0, %s95
      %s115 = sphi 0, %s117
      %s118 = sphi 0, %s115
      %s119 = sphi 0, %s118
      %s135 = sphi 0, %s119
    $region4: #{tpu_custom_call.1} parent=1 // loop_header_branch
      %19 = sbr.rel (%p17) target = $region8
    $region5: #{tpu_custom_call.1} parent=1 // loop_body
      %s21 = ssub.s32 %s16, 1
      %s22 = ssub.s32 %s16, 2
      %s23 = sadd.s32 %s16, 1
      %s24 = ssub.s32 %s16, %s23
      %p25 = scmp.eq.s32.totalorder %s24, 0
      %s27 = sadd.s32 %s26, 1
      %s28 = scalar_select %p25, %s26, %s27
      %p31 = pneg %p25
      %p32 = scmp.eq.s32.totalorder %s16, 1
      %p33 = por %p31, %p32
      %p34 = scmp.ne.s32.totalorder %s26, %s29
      %p35 = scmp.eq.s32.totalorder %s16, 0
      %p36 = por %p34, %p35
      %p37 = scmp.ne.s32.totalorder %s26, %s29
      %p38 = scmp.eq.s32.totalorder %s21, 1
      %p39 = por %p37, %p38
      %p40 = scmp.ne.s32.totalorder %s29, %s30
      %p41 = scmp.eq.s32.totalorder %s21, 0
      %p42 = por %p40, %p41
      %p43 = scmp.ne.s32.totalorder %s29, %s30
      %p44 = scmp.eq.s32.totalorder %s22, 1
      %p45 = por %p43, %p44
      %p47 = scmp.ne.s32.totalorder %s30, %s46
      %p48 = scmp.eq.s32.totalorder %s22, 0
      %p49 = por %p47, %p48
      %s51 = sadd.s32 %s50, 1
      %p54 = scmp.eq.s32.totalorder %s16, 1
      %p55 = scmp.ne.s32.totalorder %s50, %s52
      %p56 = scmp.eq.s32.totalorder %s16, 0
      %p57 = por %p55, %p56
      %p58 = scmp.ne.s32.totalorder %s50, %s52
      %p59 = scmp.eq.s32.totalorder %s21, 1
      %p60 = por %p58, %p59
      %p61 = scmp.ne.s32.totalorder %s52, %s53
      %p62 = scmp.eq.s32.totalorder %s21, 0
      %p63 = por %p61, %p62
      %p64 = scmp.ne.s32.totalorder %s52, %s53
      %p65 = scmp.eq.s32.totalorder %s22, 1
      %p66 = por %p64, %p65
      %p68 = scmp.ne.s32.totalorder %s53, %s67
      %p69 = scmp.eq.s32.totalorder %s22, 0
      %p70 = por %p68, %p69
      %s72 = sadd.s32 %s71, 1
      %p75 = scmp.eq.s32.totalorder %s16, 1
      %p76 = scmp.ne.s32.totalorder %s71, %s73
      %p77 = scmp.eq.s32.totalorder %s16, 0
      %p78 = por %p76, %p77
      %p79 = scmp.ne.s32.totalorder %s71, %s73
      %p80 = scmp.eq.s32.totalorder %s21, 1
      %p81 = por %p79, %p80
      %p82 = scmp.ne.s32.totalorder %s73, %s74
      %p83 = scmp.eq.s32.totalorder %s21, 0
      %p84 = por %p82, %p83
      %p85 = scmp.ne.s32.totalorder %s73, %s74
      %p86 = scmp.eq.s32.totalorder %s22, 1
      %p87 = por %p85, %p86
      %p89 = scmp.ne.s32.totalorder %s74, %s88
      %p90 = scmp.eq.s32.totalorder %s22, 0
      %p91 = por %p89, %p90
      %s93 = sadd.s32 %s92, 1
      %p96 = scmp.eq.s32.totalorder %s16, 1
      %p97 = scmp.ne.s32.totalorder %s92, %s94
      %p98 = scmp.eq.s32.totalorder %s16, 0
      %p99 = por %p97, %p98
      %p100 = scmp.ne.s32.totalorder %s92, %s94
      %p101 = scmp.eq.s32.totalorder %s21, 1
      %p102 = por %p100, %p101
      %p103 = scmp.ne.s32.totalorder %s94, %s95
      %p104 = scmp.eq.s32.totalorder %s21, 0
      %p105 = por %p103, %p104
      %p106 = scmp.ne.s32.totalorder %s94, %s95
      %p107 = scmp.eq.s32.totalorder %s22, 1
      %p108 = por %p106, %p107
      %p110 = scmp.ne.s32.totalorder %s95, %s109
      %p111 = scmp.eq.s32.totalorder %s22, 0
      %p112 = por %p110, %p111
      %s113 = ssub.s32 %s16, %s23
      %p114 = scmp.eq.s32.totalorder %s113, 0
      %s116 = sadd.s32 %s115, 1
      %s117 = scalar_select %p114, %s115, %s116
      %p120 = pneg %p114
      %p121 = scmp.eq.s32.totalorder %s16, 1
      %p122 = por %p120, %p121
      %p123 = scmp.ne.s32.totalorder %s115, %s118
      %p124 = scmp.eq.s32.totalorder %s16, 0
      %p125 = por %p123, %p124
      %p126 = scmp.ne.s32.totalorder %s115, %s118
      %p127 = scmp.eq.s32.totalorder %s21, 1
      %p128 = por %p126, %p127
      %p129 = scmp.ne.s32.totalorder %s118, %s119
      %p130 = scmp.eq.s32.totalorder %s21, 0
      %p131 = por %p129, %p130
      %p132 = scmp.ne.s32.totalorder %s118, %s119
      %p133 = scmp.eq.s32.totalorder %s22, 1
      %p134 = por %p132, %p133
      %p136 = scmp.ne.s32.totalorder %s119, %s135
      %p137 = scmp.eq.s32.totalorder %s22, 0
      %p138 = por %p136, %p137
      %p139 = scmp.le.s32.totalorder 1, %s16
      %p140 = scmp.lt.s32.totalorder %s16, 3
      %p141 = pnand %p139, %p140
      %p142 = pneg %p141
      // Predicated region
      $region9: #{tpu_custom_call.1} parent=5 // pred_check
        _
      $region10: #{tpu_custom_call.1} parent=5 // pred_check_branch
        %144 = sbr.rel (%p141) target = $region12
      $region11: #{tpu_custom_call.1} parent=5 // pred_region
        %s145 = ssub.s32 %s16, 1
        // Predicated region
        $region13: #{tpu_custom_call.1} parent=11 // pred_check
          %p146 = pneg %p63
        $region14: #{tpu_custom_call.1} parent=11 // pred_check_branch
          %148 = sbr.rel (%p146) target = $region16
        $region15: #{tpu_custom_call.1} parent=11 // pred_region
          _
        $region16: #{tpu_custom_call.1} parent=11 // pred_fallthru
          _
        // Predicated region
        $region17: #{tpu_custom_call.1} parent=11 // pred_check
          %p149 = pneg %p84
        $region18: #{tpu_custom_call.1} parent=11 // pred_check_branch
          %151 = sbr.rel (%p149) target = $region20
        $region19: #{tpu_custom_call.1} parent=11 // pred_region
          _
        $region20: #{tpu_custom_call.1} parent=11 // pred_fallthru
          _
        // Predicated region
        $region21: #{tpu_custom_call.1} parent=11 // pred_check
          %p152 = pneg %p105
        $region22: #{tpu_custom_call.1} parent=11 // pred_check_branch
          %154 = sbr.rel (%p152) target = $region24
        $region23: #{tpu_custom_call.1} parent=11 // pred_region
          _
        $region24: #{tpu_custom_call.1} parent=11 // pred_fallthru
          _
      $region12: #{tpu_custom_call.1} parent=5 // pred_fallthru
        _
      %p155 = scmp.lt.s32.totalorder %s16, 2
      // Predicated region
      $region25: #{tpu_custom_call.1} parent=5 // pred_check
        %p156 = pneg %p155
      $region26: #{tpu_custom_call.1} parent=5 // pred_check_branch
        %158 = sbr.rel (%p156) target = $region28
      $region27: #{tpu_custom_call.1} parent=5 // pred_region
        // Predicated region
        $region29: #{tpu_custom_call.1} parent=27 // pred_check
          %p159 = pneg %p36
        $region30: #{tpu_custom_call.1} parent=27 // pred_check_branch
          %161 = sbr.rel (%p159) target = $region32
        $region31: #{tpu_custom_call.1} parent=27 // pred_region
          %s162 = sand.u32 %s26, 1
          %s163 = scalar_lea.sflag [#allocation3], %s162
          %s164 = sand.u32 %s26, 1
          %s165 = smul.addr %s164, 12
          %s166 = scalar_lea.vmem [#allocation2], %s165
          %s168 = ssub.s32 192, 192
          %169 = vsyncadd %s163, %s168
          %s170 = smul.addr %s16, 3
          %s171 = smul.addr %s170, 64
          %s172 = scalar_lea.hbm %s0, %s171
          %s174 = sshll.u32 %s166, 4
          %s175 = int_to_ptr.vmem [resolvable:$true] %s174
          %177 = dma.hbm_to_vmem [thread:$0]  %s172, 192, %s175, %s163
        $region32: #{tpu_custom_call.1} parent=27 // pred_fallthru
          _
      $region28: #{tpu_custom_call.1} parent=5 // pred_fallthru
        _
      %p178 = scmp.le.s32.totalorder 1, %s16
      %p179 = scmp.lt.s32.totalorder %s16, 3
      %p180 = pnand %p178, %p179
      %p181 = pneg %p180
      // Predicated region
      $region33: #{tpu_custom_call.1} parent=5 // pred_check
        _
      $region34: #{tpu_custom_call.1} parent=5 // pred_check_branch
        %183 = sbr.rel (%p180) target = $region36
      $region35: #{tpu_custom_call.1} parent=5 // pred_region
        %s184 = ssub.s32 %s16, 1
        %s185 = sand.u32 %s29, 1
        %s186 = scalar_lea.sflag [#allocation3], %s185
        %s187 = sand.u32 %s29, 1
        %s188 = smul.addr %s187, 12
        %s189 = scalar_lea.vmem [#allocation2], %s188
        // Predicated region
        $region37: #{tpu_custom_call.1} parent=35 // pred_check
          %p190 = pneg %p42
        $region38: #{tpu_custom_call.1} parent=35 // pred_check_branch
          %192 = sbr.rel (%p190) target = $region40
        $region39: #{tpu_custom_call.1} parent=35 // pred_region
          %193 = dma.done %s186, 192
        $region40: #{tpu_custom_call.1} parent=35 // pred_fallthru
          _
        %s194 = sand.u32 %s29, 1
        %s195 = scalar_lea.sflag [#allocation3], %s194
        %s196 = sand.u32 %s29, 1
        %s197 = smul.addr %s196, 12
        %s198 = scalar_lea.vmem [#allocation2], %s197
        %p199 = pneg %p42
        %p200 = pneg %p39
        %p201 = pneg %p63
        %p202 = pneg %p60
        %p203 = pneg %p84
        %p204 = pneg %p81
        %p205 = pneg %p105
        %p206 = pneg %p102
        %p207 = pneg %p131
        %p208 = pneg %p128
        %s209 = sand.u32 %s118, 1
        %s210 = scalar_lea.sflag [#allocation4], %s209
        %s211 = sand.u32 %s118, 1
        %s212 = smul.addr %s211, 8
        %s213 = scalar_lea.vmem [#allocation5], %s212
        %v214 = vld [vmem:[%s3] sm:$0xf]
        %216 = vset.pattern.permute.xlu0 0
        %217 = vperm.xlu0 %216, %v214
        %v218 = vpop.permute.xlu0 %217
        %v220 = vld [vmem:[%s189] sm:$0xff]
        %v221 = vld [vmem:[%s1] sm:$0xf]
        %223 = vset.pattern.permute.xlu0 0
        %224 = vperm.xlu0 %223, %v221
        %v225 = vpop.permute.xlu0 %224
        %v227 = vunpack.c.l.s4 839922192
        %v228 = vunpack.c.0.s8 %v227
        %v229 = vlaneseq
        %v230 = vshrl.u32 %v229, 7
        %v231 = vsub.s32 %v228, %v230
        %v232 = vrot.slane %v225, %v231
        %v234 = vmul.f32 %v220, %v232
        %v235 = vadd.f32 %v234, 0.0
        %236 = vset.pattern.permute.xlu0 9
        %237 = vperm.xlu0 %236, %v221
        %v238 = vpop.permute.xlu0 %237
        %v240 = vunpack.c.l.s4 839922192
        %v241 = vunpack.c.0.s8 %v240
        %v242 = vlaneseq
        %v243 = vshrl.u32 %v242, 7
        %v244 = vsub.s32 %v241, %v243
        %v245 = vrot.slane %v238, %v244
        %v247 = vmul.f32 %v220, %v245
        %v248 = vadd.f32 %v247, 0.0
        %v249 = vld [vmem:[%s189] sm:$0xff]
        %v250 = vld [vmem:[%s189 + $0x8] sm:$0xf]
        %251 = vset.pattern.permute.xlu0 1
        %252 = vperm.xlu0 %251, %v221
        %v253 = vpop.permute.xlu0 %252
        %v255 = vunpack.c.l.s4 839922192
        %v256 = vunpack.c.0.s8 %v255
        %v257 = vlaneseq
        %v258 = vshrl.u32 %v257, 7
        %v259 = vsub.s32 %v256, %v258
        %v260 = vrot.slane %v253, %v259
        %v262 = vmul.f32 %v249, %v260
        %v263 = vmul.f32 %v250, %v260
        %v264 = vadd.f32 %v262, 0.0
        %v265 = vadd.f32 %v263, 0.0
        %266 = vset.pattern.permute.xlu0 10
        %267 = vperm.xlu0 %266, %v221
        %v268 = vpop.permute.xlu0 %267
        %v270 = vunpack.c.l.s4 839922192
        %v271 = vunpack.c.0.s8 %v270
        %v272 = vlaneseq
        %v273 = vshrl.u32 %v272, 7
        %v274 = vsub.s32 %v271, %v273
        %v275 = vrot.slane %v268, %v274
        %v277 = vmul.f32 %v249, %v275
        %v278 = vmul.f32 %v250, %v275
        %v279 = vadd.f32 %v277, 0.0
        %v280 = vadd.f32 %v278, 0.0
        %281 = vset.pattern.permute.xlu0 2
        %282 = vperm.xlu0 %281, %v221
        %v283 = vpop.permute.xlu0 %282
        %v285 = vunpack.c.l.s4 839922192
        %v286 = vunpack.c.0.s8 %v285
        %v287 = vlaneseq
        %v288 = vshrl.u32 %v287, 7
        %v289 = vsub.s32 %v286, %v288
        %v290 = vrot.slane %v283, %v289
        %v292 = vmul.f32 %v249, %v290
        %v293 = vmul.f32 %v250, %v290
        %296 = vrot.lane.b32.xlu0 %v292, 126
        %v297 = vpop.permute.xlu0 %296
        %298 = vrot.lane.b32.xlu0 %v293, 126
        %v299 = vpop.permute.xlu0 %298
        %v300 = vrot.slane %v297, 4
        %v301 = vrot.slane %v299, 4
        %vm302 = vcmask 1043456
        %v303 = vsel %vm302, %v300, %v301
        %vm304 = vcmask 1031168
        %v305 = vsel %vm304, %v297, %v303
        %v307 = vadd.f32 %v235, %v305
        %308 = vset.pattern.permute.xlu0 11
        %309 = vperm.xlu0 %308, %v221
        %v310 = vpop.permute.xlu0 %309
        %v312 = vunpack.c.l.s4 839922192
        %v313 = vunpack.c.0.s8 %v312
        %v314 = vlaneseq
        %v315 = vshrl.u32 %v314, 7
        %v316 = vsub.s32 %v313, %v315
        %v317 = vrot.slane %v310, %v316
        %v319 = vmul.f32 %v249, %v317
        %v320 = vmul.f32 %v250, %v317
        %323 = vrot.lane.b32.xlu0 %v319, 126
        %v324 = vpop.permute.xlu0 %323
        %325 = vrot.lane.b32.xlu0 %v320, 126
        %v326 = vpop.permute.xlu0 %325
        %v327 = vrot.slane %v324, 4
        %v328 = vrot.slane %v326, 4
        %v329 = vsel %vm302, %v327, %v328
        %v330 = vsel %vm304, %v324, %v329
        %v332 = vadd.f32 %v248, %v330
        %333 = vset.pattern.permute.xlu0 3
        %334 = vperm.xlu0 %333, %v221
        %v335 = vpop.permute.xlu0 %334
        %v337 = vunpack.c.l.s4 839922192
        %v338 = vunpack.c.0.s8 %v337
        %v339 = vlaneseq
        %v340 = vshrl.u32 %v339, 7
        %v341 = vsub.s32 %v338, %v340
        %v342 = vrot.slane %v335, %v341
        %v344 = vmul.f32 %v249, %v342
        %v345 = vmul.f32 %v250, %v342
        %348 = vrot.lane.b32.xlu0 %v344, 113
        %v349 = vpop.permute.xlu0 %348
        %350 = vrot.lane.b32.xlu0 %v345, 113
        %v351 = vpop.permute.xlu0 %350
        %v352 = vrot.slane %v349, 4
        %v353 = vrot.slane %v351, 4
        %v354 = vsel %vm302, %v352, %v353
        %vm355 = vcmask 924672
        %v356 = vsel %vm355, %v349, %v354
        %v359 = vadd.f32 %v264, %v356
        %v360 = vadd.f32 %v265, %v351
        %361 = vset.pattern.permute.xlu0 12
        %362 = vperm.xlu0 %361, %v221
        %v363 = vpop.permute.xlu0 %362
        %v365 = vunpack.c.l.s4 839922192
        %v366 = vunpack.c.0.s8 %v365
        %v367 = vlaneseq
        %v368 = vshrl.u32 %v367, 7
        %v369 = vsub.s32 %v366, %v368
        %v370 = vrot.slane %v363, %v369
        %v372 = vmul.f32 %v249, %v370
        %v373 = vmul.f32 %v250, %v370
        %376 = vrot.lane.b32.xlu0 %v372, 113
        %v377 = vpop.permute.xlu0 %376
        %378 = vrot.lane.b32.xlu0 %v373, 113
        %v379 = vpop.permute.xlu0 %378
        %v380 = vrot.slane %v377, 4
        %v381 = vrot.slane %v379, 4
        %v382 = vsel %vm302, %v380, %v381
        %v383 = vsel %vm355, %v377, %v382
        %v386 = vadd.f32 %v279, %v383
        %v387 = vadd.f32 %v280, %v379
        %388 = vset.pattern.permute.xlu0 4
        %389 = vperm.xlu0 %388, %v221
        %v390 = vpop.permute.xlu0 %389
        %v392 = vunpack.c.l.s4 839922192
        %v393 = vunpack.c.0.s8 %v392
        %v394 = vlaneseq
        %v395 = vshrl.u32 %v394, 7
        %v396 = vsub.s32 %v393, %v395
        %v397 = vrot.slane %v390, %v396
        %v399 = vmul.f32 %v249, %v397
        %v400 = vmul.f32 %v250, %v397
        %403 = vrot.lane.b32.xlu0 %v399, 111
        %v404 = vpop.permute.xlu0 %403
        %405 = vrot.lane.b32.xlu0 %v400, 111
        %v406 = vpop.permute.xlu0 %405
        %v407 = vrot.slane %v404, 4
        %v408 = vrot.slane %v406, 4
        %v409 = vsel %vm302, %v407, %v408
        %vm410 = vcmask 908288
        %v411 = vsel %vm410, %v404, %v409
        %v413 = vadd.f32 %v307, %v411
        %414 = vset.pattern.permute.xlu0 13
        %415 = vperm.xlu0 %414, %v221
        %v416 = vpop.permute.xlu0 %415
        %v418 = vunpack.c.l.s4 839922192
        %v419 = vunpack.c.0.s8 %v418
        %v420 = vlaneseq
        %v421 = vshrl.u32 %v420, 7
        %v422 = vsub.s32 %v419, %v421
        %v423 = vrot.slane %v416, %v422
        %v425 = vmul.f32 %v249, %v423
        %v426 = vmul.f32 %v250, %v423
        %429 = vrot.lane.b32.xlu0 %v425, 111
        %v430 = vpop.permute.xlu0 %429
        %431 = vrot.lane.b32.xlu0 %v426, 111
        %v432 = vpop.permute.xlu0 %431
        %v433 = vrot.slane %v430, 4
        %v434 = vrot.slane %v432, 4
        %v435 = vsel %vm302, %v433, %v434
        %v436 = vsel %vm410, %v430, %v435
        %v438 = vadd.f32 %v332, %v436
        %439 = vset.pattern.permute.xlu0 5
        %440 = vperm.xlu0 %439, %v221
        %v441 = vpop.permute.xlu0 %440
        %v443 = vunpack.c.l.s4 839922192
        %v444 = vunpack.c.0.s8 %v443
        %v445 = vlaneseq
        %v446 = vshrl.u32 %v445, 7
        %v447 = vsub.s32 %v444, %v446
        %v448 = vrot.slane %v441, %v447
        %v450 = vmul.f32 %v249, %v448
        %v451 = vmul.f32 %v250, %v448
        %454 = vrot.lane.b32.xlu0 %v450, 111
        %v455 = vpop.permute.xlu0 %454
        %456 = vrot.lane.b32.xlu0 %v451, 111
        %v457 = vpop.permute.xlu0 %456
        %v458 = vrot.slane %v455, 4
        %v459 = vrot.slane %v457, 4
        %v460 = vsel %vm302, %v458, %v459
        %v461 = vsel %vm410, %v455, %v460
        %v464 = vadd.f32 %v359, %v461
        %v465 = vadd.f32 %v360, %v457
        %466 = vset.pattern.permute.xlu0 14
        %467 = vperm.xlu0 %466, %v221
        %v468 = vpop.permute.xlu0 %467
        %v470 = vunpack.c.l.s4 839922192
        %v471 = vunpack.c.0.s8 %v470
        %v472 = vlaneseq
        %v473 = vshrl.u32 %v472, 7
        %v474 = vsub.s32 %v471, %v473
        %v475 = vrot.slane %v468, %v474
        %v477 = vmul.f32 %v249, %v475
        %v478 = vmul.f32 %v250, %v475
        %481 = vrot.lane.b32.xlu0 %v477, 111
        %v482 = vpop.permute.xlu0 %481
        %483 = vrot.lane.b32.xlu0 %v478, 111
        %v484 = vpop.permute.xlu0 %483
        %v485 = vrot.slane %v482, 4
        %v486 = vrot.slane %v484, 4
        %v487 = vsel %vm302, %v485, %v486
        %v488 = vsel %vm410, %v482, %v487
        %v491 = vadd.f32 %v386, %v488
        %v492 = vadd.f32 %v387, %v484
        %493 = vset.pattern.permute.xlu0 6
        %494 = vperm.xlu0 %493, %v221
        %v495 = vpop.permute.xlu0 %494
        %v497 = vunpack.c.l.s4 839922192
        %v498 = vunpack.c.0.s8 %v497
        %v499 = vlaneseq
        %v500 = vshrl.u32 %v499, 7
        %v501 = vsub.s32 %v498, %v500
        %v502 = vrot.slane %v495, %v501
        %v504 = vmul.f32 %v249, %v502
        %v505 = vmul.f32 %v250, %v502
        %508 = vrot.lane.b32.xlu0 %v504, 96
        %v509 = vpop.permute.xlu0 %508
        %510 = vrot.lane.b32.xlu0 %v505, 96
        %v511 = vpop.permute.xlu0 %510
        %v512 = vrot.slane %v509, 4
        %v513 = vrot.slane %v511, 4
        %v514 = vsel %vm302, %v512, %v513
        %vm515 = vcmask 785408
        %v516 = vsel %vm515, %v509, %v514
        %v518 = vadd.f32 %v413, %v516
        %519 = vset.pattern.permute.xlu0 15
        %520 = vperm.xlu0 %519, %v221
        %v521 = vpop.permute.xlu0 %520
        %v523 = vunpack.c.l.s4 839922192
        %v524 = vunpack.c.0.s8 %v523
        %v525 = vlaneseq
        %v526 = vshrl.u32 %v525, 7
        %v527 = vsub.s32 %v524, %v526
        %v528 = vrot.slane %v521, %v527
        %v530 = vmul.f32 %v249, %v528
        %v531 = vmul.f32 %v250, %v528
        %534 = vrot.lane.b32.xlu0 %v530, 96
        %v535 = vpop.permute.xlu0 %534
        %536 = vrot.lane.b32.xlu0 %v531, 96
        %v537 = vpop.permute.xlu0 %536
        %v538 = vrot.slane %v535, 4
        %v539 = vrot.slane %v537, 4
        %v540 = vsel %vm302, %v538, %v539
        %v541 = vsel %vm515, %v535, %v540
        %v543 = vadd.f32 %v438, %v541
        %544 = vset.pattern.permute.xlu0 7
        %545 = vperm.xlu0 %544, %v221
        %v546 = vpop.permute.xlu0 %545
        %v548 = vunpack.c.l.s4 839922192
        %v549 = vunpack.c.0.s8 %v548
        %v550 = vlaneseq
        %v551 = vshrl.u32 %v550, 7
        %v552 = vsub.s32 %v549, %v551
        %v553 = vrot.slane %v546, %v552
        %v555 = vmul.f32 %v249, %v553
        %v556 = vmul.f32 %v250, %v553
        %559 = vrot.lane.b32.xlu0 %v555, 96
        %v560 = vpop.permute.xlu0 %559
        %561 = vrot.lane.b32.xlu0 %v556, 96
        %v562 = vpop.permute.xlu0 %561
        %v563 = vrot.slane %v560, 4
        %v564 = vrot.slane %v562, 4
        %v565 = vsel %vm302, %v563, %v564
        %v566 = vsel %vm515, %v560, %v565
        %v569 = vadd.f32 %v464, %v566
        %v570 = vadd.f32 %v465, %v562
        %571 = vset.pattern.permute.xlu0 16
        %572 = vperm.xlu0 %571, %v221
        %v573 = vpop.permute.xlu0 %572
        %v575 = vunpack.c.l.s4 839922192
        %v576 = vunpack.c.0.s8 %v575
        %v577 = vlaneseq
        %v578 = vshrl.u32 %v577, 7
        %v579 = vsub.s32 %v576, %v578
        %v580 = vrot.slane %v573, %v579
        %v582 = vmul.f32 %v249, %v580
        %v583 = vmul.f32 %v250, %v580
        %586 = vrot.lane.b32.xlu0 %v582, 96
        %v587 = vpop.permute.xlu0 %586
        %588 = vrot.lane.b32.xlu0 %v583, 96
        %v589 = vpop.permute.xlu0 %588
        %v590 = vrot.slane %v587, 4
        %v591 = vrot.slane %v589, 4
        %v592 = vsel %vm302, %v590, %v591
        %v593 = vsel %vm515, %v587, %v592
        %v596 = vadd.f32 %v491, %v593
        %v597 = vadd.f32 %v492, %v589
        %598 = vset.pattern.permute.xlu0 8
        %599 = vperm.xlu0 %598, %v221
        %v600 = vpop.permute.xlu0 %599
        %v602 = vunpack.c.l.s4 839922192
        %v603 = vunpack.c.0.s8 %v602
        %v604 = vlaneseq
        %v605 = vshrl.u32 %v604, 7
        %v606 = vsub.s32 %v603, %v605
        %v607 = vrot.slane %v600, %v606
        %v609 = vmul.f32 %v249, %v607
        %v610 = vmul.f32 %v250, %v607
        %613 = vrot.lane.b32.xlu0 %v609, 94
        %v614 = vpop.permute.xlu0 %613
        %615 = vrot.lane.b32.xlu0 %v610, 94
        %v616 = vpop.permute.xlu0 %615
        %v617 = vrot.slane %v614, 4
        %v618 = vrot.slane %v616, 4
        %v619 = vsel %vm302, %v617, %v618
        %vm620 = vcmask 769024
        %v621 = vsel %vm620, %v614, %v619
        %v623 = vadd.f32 %v518, %v621
        %624 = vset.pattern.permute.xlu0 17
        %625 = vperm.xlu0 %624, %v221
        %v626 = vpop.permute.xlu0 %625
        %v628 = vunpack.c.l.s4 839922192
        %v629 = vunpack.c.0.s8 %v628
        %v630 = vlaneseq
        %v631 = vshrl.u32 %v630, 7
        %v632 = vsub.s32 %v629, %v631
        %v633 = vrot.slane %v626, %v632
        %v635 = vmul.f32 %v249, %v633
        %v636 = vmul.f32 %v250, %v633
        %639 = vrot.lane.b32.xlu0 %v635, 94
        %v640 = vpop.permute.xlu0 %639
        %641 = vrot.lane.b32.xlu0 %v636, 94
        %v642 = vpop.permute.xlu0 %641
        %v643 = vrot.slane %v640, 4
        %v644 = vrot.slane %v642, 4
        %v645 = vsel %vm302, %v643, %v644
        %v646 = vsel %vm620, %v640, %v645
        %v648 = vadd.f32 %v543, %v646
        %651 = vrot.lane.b32.xlu0 %v569, 127
        %v652 = vpop.permute.xlu0 %651
        %653 = vrot.lane.b32.xlu0 %v570, 127
        %v654 = vpop.permute.xlu0 %653
        %v655 = vrot.slane %v652, 4
        %v656 = vrot.slane %v654, 4
        %v657 = vsel %vm302, %v655, %v656
        %vm658 = vcmask 1039360
        %v659 = vsel %vm658, %v652, %v657
        %v661 = vadd.f32 %v623, %v659
        %v662 = vld [vmem:[%s2] sm:$0xf]
        %664 = vset.pattern.permute.xlu0 0
        %665 = vperm.xlu0 %664, %v662
        %v666 = vpop.permute.xlu0 %665
        %v669 = vlaneseq
        %v670 = vshrl.u32 %v669, 7
        %v671 = vsub.s32 0, %v670
        %v672 = vrot.slane %v661, %v671
        %v673 = vlaneseq
        %v674 = vshrl.u32 %v673, 7
        %v675 = vsub.s32 4, %v674
        %v676 = vrot.slane %v661, %v675
        %v679 = vlaneseq
        %v680 = vshrl.u32 %v679, 7
        %v681 = vsub.s32 0, %v680
        %v682 = vrot.slane %v672, %v681
        %v683 = vlaneseq
        %v684 = vshrl.u32 %v683, 7
        %v685 = vsub.s32 0, %v684
        %v686 = vrot.slane %v676, %v685
        %v687 = vmul.f32 %v666, %v682
        %v688 = vmul.f32 %v666, %v686
        %v689 = vadd.f32 %v218, %v687
        %v690 = vadd.f32 %v218, %v688
        %691 = vset.pattern.permute.xlu0 1
        %692 = vperm.xlu0 %691, %v662
        %v693 = vpop.permute.xlu0 %692
        %v695 = vlaneseq
        %v696 = vshrl.u32 %v695, 7
        %v697 = vsub.s32 1, %v696
        %v698 = vrot.slane %v661, %v697
        %v699 = vlaneseq
        %v700 = vshrl.u32 %v699, 7
        %v701 = vsub.s32 5, %v700
        %v702 = vrot.slane %v661, %v701
        %v705 = vlaneseq
        %v706 = vshrl.u32 %v705, 7
        %v707 = vsub.s32 1, %v706
        %v708 = vrot.slane %v698, %v707
        %v709 = vlaneseq
        %v710 = vshrl.u32 %v709, 7
        %v711 = vsub.s32 1, %v710
        %v712 = vrot.slane %v702, %v711
        %v713 = vmul.f32 %v693, %v708
        %v714 = vmul.f32 %v693, %v712
        %v715 = vadd.f32 %v689, %v713
        %v716 = vadd.f32 %v690, %v714
        %717 = vset.pattern.permute.xlu0 2
        %718 = vperm.xlu0 %717, %v662
        %v719 = vpop.permute.xlu0 %718
        %v721 = vlaneseq
        %v722 = vshrl.u32 %v721, 7
        %v723 = vsub.s32 2, %v722
        %v724 = vrot.slane %v661, %v723
        %v725 = vlaneseq
        %v726 = vshrl.u32 %v725, 7
        %v727 = vsub.s32 6, %v726
        %v728 = vrot.slane %v661, %v727
        %v731 = vlaneseq
        %v732 = vshrl.u32 %v731, 7
        %v733 = vsub.s32 2, %v732
        %v734 = vrot.slane %v724, %v733
        %v735 = vlaneseq
        %v736 = vshrl.u32 %v735, 7
        %v737 = vsub.s32 2, %v736
        %v738 = vrot.slane %v728, %v737
        %v739 = vmul.f32 %v719, %v734
        %v740 = vmul.f32 %v719, %v738
        %v741 = vadd.f32 %v715, %v739
        %v742 = vadd.f32 %v716, %v740
        %743 = vset.pattern.permute.xlu0 3
        %744 = vperm.xlu0 %743, %v662
        %v745 = vpop.permute.xlu0 %744
        %v747 = vlaneseq
        %v748 = vshrl.u32 %v747, 7
        %v749 = vsub.s32 3, %v748
        %v750 = vrot.slane %v661, %v749
        %v751 = vlaneseq
        %v752 = vshrl.u32 %v751, 7
        %v753 = vsub.s32 7, %v752
        %v754 = vrot.slane %v661, %v753
        %v757 = vlaneseq
        %v758 = vshrl.u32 %v757, 7
        %v759 = vsub.s32 3, %v758
        %v760 = vrot.slane %v750, %v759
        %v761 = vlaneseq
        %v762 = vshrl.u32 %v761, 7
        %v763 = vsub.s32 3, %v762
        %v764 = vrot.slane %v754, %v763
        %v765 = vmul.f32 %v745, %v760
        %v766 = vmul.f32 %v745, %v764
        %v767 = vadd.f32 %v741, %v765
        %v768 = vadd.f32 %v742, %v766
        %771 = vrot.lane.b32.xlu0 %v596, 127
        %v772 = vpop.permute.xlu0 %771
        %773 = vrot.lane.b32.xlu0 %v597, 127
        %v774 = vpop.permute.xlu0 %773
        %v775 = vrot.slane %v772, 4
        %v776 = vrot.slane %v774, 4
        %v777 = vsel %vm302, %v775, %v776
        %v778 = vsel %vm658, %v772, %v777
        %v780 = vadd.f32 %v648, %v778
        %781 = vset.pattern.permute.xlu0 4
        %782 = vperm.xlu0 %781, %v662
        %v783 = vpop.permute.xlu0 %782
        %v786 = vlaneseq
        %v787 = vshrl.u32 %v786, 7
        %v788 = vsub.s32 0, %v787
        %v789 = vrot.slane %v780, %v788
        %v790 = vlaneseq
        %v791 = vshrl.u32 %v790, 7
        %v792 = vsub.s32 4, %v791
        %v793 = vrot.slane %v780, %v792
        %v796 = vlaneseq
        %v797 = vshrl.u32 %v796, 7
        %v798 = vsub.s32 0, %v797
        %v799 = vrot.slane %v789, %v798
        %v800 = vlaneseq
        %v801 = vshrl.u32 %v800, 7
        %v802 = vsub.s32 0, %v801
        %v803 = vrot.slane %v793, %v802
        %v804 = vmul.f32 %v783, %v799
        %v805 = vmul.f32 %v783, %v803
        %v806 = vadd.f32 %v767, %v804
        %v807 = vadd.f32 %v768, %v805
        %808 = vset.pattern.permute.xlu0 5
        %809 = vperm.xlu0 %808, %v662
        %v810 = vpop.permute.xlu0 %809
        %v812 = vlaneseq
        %v813 = vshrl.u32 %v812, 7
        %v814 = vsub.s32 1, %v813
        %v815 = vrot.slane %v780, %v814
        %v816 = vlaneseq
        %v817 = vshrl.u32 %v816, 7
        %v818 = vsub.s32 5, %v817
        %v819 = vrot.slane %v780, %v818
        %v822 = vlaneseq
        %v823 = vshrl.u32 %v822, 7
        %v824 = vsub.s32 1, %v823
        %v825 = vrot.slane %v815, %v824
        %v826 = vlaneseq
        %v827 = vshrl.u32 %v826, 7
        %v828 = vsub.s32 1, %v827
        %v829 = vrot.slane %v819, %v828
        %v830 = vmul.f32 %v810, %v825
        %v831 = vmul.f32 %v810, %v829
        %v832 = vadd.f32 %v806, %v830
        %v833 = vadd.f32 %v807, %v831
        %834 = vset.pattern.permute.xlu0 6
        %835 = vperm.xlu0 %834, %v662
        %v836 = vpop.permute.xlu0 %835
        %v838 = vlaneseq
        %v839 = vshrl.u32 %v838, 7
        %v840 = vsub.s32 2, %v839
        %v841 = vrot.slane %v780, %v840
        %v842 = vlaneseq
        %v843 = vshrl.u32 %v842, 7
        %v844 = vsub.s32 6, %v843
        %v845 = vrot.slane %v780, %v844
        %v848 = vlaneseq
        %v849 = vshrl.u32 %v848, 7
        %v850 = vsub.s32 2, %v849
        %v851 = vrot.slane %v841, %v850
        %v852 = vlaneseq
        %v853 = vshrl.u32 %v852, 7
        %v854 = vsub.s32 2, %v853
        %v855 = vrot.slane %v845, %v854
        %v856 = vmul.f32 %v836, %v851
        %v857 = vmul.f32 %v836, %v855
        %v858 = vadd.f32 %v832, %v856
        %v859 = vadd.f32 %v833, %v857
        %860 = vset.pattern.permute.xlu0 7
        %861 = vperm.xlu0 %860, %v662
        %v862 = vpop.permute.xlu0 %861
        %v864 = vlaneseq
        %v865 = vshrl.u32 %v864, 7
        %v866 = vsub.s32 3, %v865
        %v867 = vrot.slane %v780, %v866
        %v868 = vlaneseq
        %v869 = vshrl.u32 %v868, 7
        %v870 = vsub.s32 7, %v869
        %v871 = vrot.slane %v780, %v870
        %v874 = vlaneseq
        %v875 = vshrl.u32 %v874, 7
        %v876 = vsub.s32 3, %v875
        %v877 = vrot.slane %v867, %v876
        %v878 = vlaneseq
        %v879 = vshrl.u32 %v878, 7
        %v880 = vsub.s32 3, %v879
        %v881 = vrot.slane %v871, %v880
        %v882 = vmul.f32 %v862, %v877
        %v883 = vmul.f32 %v862, %v881
        %v884 = vadd.f32 %v858, %v882
        %v885 = vadd.f32 %v859, %v883
        %v888 = vcombine.low %v884, %v885
        %890 = vst [vmem:[%s213] sm:$0xff] %v888
        %s891 = sand.u32 %s118, 1
        %s892 = scalar_lea.sflag [#allocation4], %s891
        %s893 = sand.u32 %s118, 1
        %s894 = smul.addr %s893, 8
        %s895 = scalar_lea.vmem [#allocation5], %s894
        // Predicated region
        $region41: #{tpu_custom_call.1} parent=35 // pred_check
          %p896 = pneg %p128
        $region42: #{tpu_custom_call.1} parent=35 // pred_check_branch
          %898 = sbr.rel (%p896) target = $region44
        $region43: #{tpu_custom_call.1} parent=35 // pred_region
          %s900 = ssub.s32 128, 128
          %901 = vsyncadd %s892, %s900
          %s902 = smul.addr %s21, 2
          %s903 = smul.addr %s902, 64
          %s904 = scalar_lea.hbm %s4, %s903
          %s906 = sshll.u32 %s895, 4
          %s907 = int_to_ptr.vmem [resolvable:$true] %s906
          %909 = dma.vmem_to_hbm [thread:$0]  %s907, 128, %s904, %s892
        $region44: #{tpu_custom_call.1} parent=35 // pred_fallthru
          _
      $region36: #{tpu_custom_call.1} parent=5 // pred_fallthru
        _
      %p910 = scmp.le.s32.totalorder 2, %s16
      // Predicated region
      $region45: #{tpu_custom_call.1} parent=5 // pred_check
        %p911 = pneg %p910
      $region46: #{tpu_custom_call.1} parent=5 // pred_check_branch
        %913 = sbr.rel (%p911) target = $region48
      $region47: #{tpu_custom_call.1} parent=5 // pred_region
        %s914 = ssub.s32 %s16, 2
        // Predicated region
        $region49: #{tpu_custom_call.1} parent=47 // pred_check
          %p915 = pneg %p134
        $region50: #{tpu_custom_call.1} parent=47 // pred_check_branch
          %917 = sbr.rel (%p915) target = $region52
        $region51: #{tpu_custom_call.1} parent=47 // pred_region
          %s918 = sand.u32 %s119, 1
          %s919 = scalar_lea.sflag [#allocation4], %s918
          %s920 = sand.u32 %s119, 1
          %s921 = smul.addr %s920, 8
          %s922 = scalar_lea.vmem [#allocation5], %s921
          %923 = dma.done %s919, 128
        $region52: #{tpu_custom_call.1} parent=47 // pred_fallthru
          _
      $region48: #{tpu_custom_call.1} parent=5 // pred_fallthru
        _
    $region6: #{tpu_custom_call.1} parent=1 // loop_footer
      %s20 = sadd.s32 1, %s16
    $region7: #{tpu_custom_call.1} parent=1 // loop_footer_branch
      %15 = sbr.rel target = $region3
    $region8: #{tpu_custom_call.1} parent=1 // loop_exit
      _
    %924 = vsyncpa [#allocation3], 1
    %s925 = scalar_lea.sflag [#allocation3], 1
    %926 = vsyncpa %s925, 1
    %927 = vsyncpa [#allocation4], 1
    %s928 = scalar_lea.sflag [#allocation4], 1
    %929 = vsyncpa %s928, 1

</llo_original>
